<compile_context>
chip_gen: v7x
topology: tpu7x:2x2x1
jax: 0.10.0
libtpu: 0.0.40
codegen_flags: <defaults>
</compile_context>

<pallas_src>
import jax
import jax.numpy as jnp
from jax.experimental import pallas as pl
from jax.experimental.pallas import tpu as pltpu


_LANE = 128
_SUBLANE = 32                           # multiple of min sublane tile for f32/bf16/int8
_MAX_COLS = 8192                        # cap on lane width of the 2D view
_TARGET_BLOCK_BYTES = 2 * 1024 * 1024   # ~2 MiB per block -> ~8 MiB resident (2x in + 2x out)


def _copy_kernel(x_ref, o_ref):
    o_ref[...] = x_ref[...]


def _pick_cols(n):
    """Largest 128 * 2^k (<= _MAX_COLS) dividing n, or None if 128 doesn't divide n."""
    if n % _LANE != 0:
        return None
    c = _LANE
    while c * 2 <= _MAX_COLS and n % (c * 2) == 0:
        c *= 2
    return c


def _copy_2d(x2d, row_tile):
    rows, cols = x2d.shape
    grid = (pl.cdiv(rows, row_tile),)   # last block may be partial -> masked writes
    return pl.pallas_call(
        _copy_kernel,
        out_shape=jax.ShapeDtypeStruct((rows, cols), x2d.dtype),
        grid_spec=pltpu.PrefetchScalarGridSpec(
            num_scalar_prefetch=0,
            grid=grid,
            in_specs=[pl.BlockSpec((row_tile, cols), lambda i: (i, 0))],
            out_specs=pl.BlockSpec((row_tile, cols), lambda i: (i, 0)),
        ),
        compiler_params=pltpu.CompilerParams(
            dimension_semantics=("parallel",),
        ),
    )(x2d)


def _pallas_copy_flat(flat):
    """Copies a 1-D array through a tiled Pallas kernel, preserving order."""
    n = flat.shape[0]
    if n == 0:
        return flat
    itemsize = flat.dtype.itemsize

    cols = _pick_cols(n)
    pad = 0
    if cols is None:
        # Rare ragged path: element count not a multiple of 128.  Pad to the
        # next lane boundary (<= 127 elems) so the lane-dense kernel applies,
        # then drop the tail.  Costs extra HBM passes but only for odd sizes.
        pad = (-n) % _LANE
        flat = jnp.pad(flat, (0, pad))
        cols = _pick_cols(n + pad)

    n_eff = n + pad
    rows = n_eff // cols

    # Row tile: ~2 MiB blocks, a multiple of 32 sublanes (safe for all dtypes),
    # capped at the full row count (full-extent blocks have no divisibility
    # constraint, so tiny inputs become a single block with no grid overhead).
    row_tile = max(_SUBLANE,
                   (_TARGET_BLOCK_BYTES // (cols * itemsize)) // _SUBLANE * _SUBLANE)
    row_tile = min(row_tile, rows)

    out2d = _copy_2d(flat.reshape(rows, cols), row_tile)
    out_flat = out2d.reshape(-1)
    if pad:
        out_flat = out_flat[:n]
    return out_flat


# ----------------------------------------------------------------------------
# View module equivalent.
# ----------------------------------------------------------------------------
def _resolve_size(size, total):
    """Resolve a PyTorch-style view size (possibly containing -1)."""
    if isinstance(size, int):
        size = (size,)
    size = tuple(int(s) for s in size)
    if -1 in size:
        idx = size.index(-1)
        known = 1
        for j, s in enumerate(size):
            if j != idx:
                known *= s
        assert known != 0 and total % known == 0, "invalid view size"
        size = size[:idx] + (total // known,) + size[idx + 1:]
    prod = 1
    for s in size:
        prod *= s
    assert prod == total, "view size incompatible with number of elements"
    return size


class View:
    """JAX/Pallas equivalent of the PyTorch View nn.Module."""

    def __init__(self, size):
        self.size = size

    def __call__(self, tensor):
        total = tensor.size
        out_size = _resolve_size(self.size, total)
        flat = tensor.reshape(-1)          # metadata-only for contiguous input
        copied = _pallas_copy_flat(flat)   # the data movement (Pallas kernel)
        return copied.reshape(out_size)    # metadata-only, like .view()


if __name__ == "__main__":
    key = jax.random.PRNGKey(0)

    # 1) Small NCHW input consistent with typical usage of View -> single-block path.
    x = jax.random.normal(key, (2, 4, 16, 16), dtype=jnp.float32)
    y = jax.block_until_ready(View((2, -1))(x))
    ref = x.reshape(2, -1)
    assert y.shape == ref.shape and y.dtype == ref.dtype
    assert bool(jnp.array_equal(y, ref))

    # 2) Medium input -> multi-block lane-dense tiled path (grid > 1).
    x2 = jax.random.normal(jax.random.PRNGKey(1), (1, 8, 256, 512), dtype=jnp.float32)
    y2 = jax.block_until_ready(View((8, -1))(x2))
    assert bool(jnp.array_equal(y2, x2.reshape(8, -1)))

    # 3) Row count not divisible by the row tile -> masked partial last block.
    x3 = jax.random.normal(jax.random.PRNGKey(2), (3, 256, 32, 32), dtype=jnp.float32)
    y3 = jax.block_until_ready(View((-1, 1024))(x3))
    assert bool(jnp.array_equal(y3, x3.reshape(-1, 1024)))

    print("KERNEL_OK")
</pallas_src>

<mosaic_0001>
module attributes {stable_mosaic.version = 11 : i64} {
  func.func @_copy_kernel(%arg0: i32, %arg1: memref<1x2048xf32, #tpu.memory_space<vmem>>, %arg2: memref<1x2048xf32, #tpu.memory_space<vmem>>) attributes {dimension_semantics = [#tpu.dimension_semantics<parallel>], iteration_bounds = array<i64: 1>, scalar_prefetch = 0 : i64, scratch_operands = 0 : i64, tpu.core_type = #tpu.core_type<tc>, window_params = [{transform_indices = @transform_0, window_bounds = array<i64: 1, 2048>}, {transform_indices = @transform_1, window_bounds = array<i64: 1, 2048>}]} {
    %c0 = arith.constant 0 : index
    %c0_0 = arith.constant 0 : index
    %0 = vector.load %arg1[%c0, %c0_0] : memref<1x2048xf32, #tpu.memory_space<vmem>>, vector<1x2048xf32>
    %c0_1 = arith.constant 0 : index
    %c0_2 = arith.constant 0 : index
    %1 = vector.load %arg2[%c0_1, %c0_2] : memref<1x2048xf32, #tpu.memory_space<vmem>>, vector<1x2048xf32>
    tpu.vector_store %arg2[%c0_1, %c0_2], %0 {strides = array<i32>} : memref<1x2048xf32, #tpu.memory_space<vmem>>, vector<1x2048xf32>,
    return
  }
  func.func @transform_0(%arg0: i32) -> (i32, i32) {
    %c0_i32 = arith.constant 0 : i32
    %c0_i32_0 = arith.constant 0 : i32
    return %arg0, %c0_i32 : i32, i32
  }
  func.func @transform_1(%arg0: i32) -> (i32, i32) {
    %c0_i32 = arith.constant 0 : i32
    %c0_i32_0 = arith.constant 0 : i32
    return %arg0, %c0_i32 : i32, i32
  }
}

</mosaic_0001>

<llo_original>
// kernel: tpu_custom_call.1
$region0: #{tpu_custom_call.1}
  #allocation0 [shape = 'u32[]', space=smem, size = 0x4, offset = 0x4, fixed_abs, tag = 'smem constant byte address 0x4 - core index']
  #allocation1 [shape = 'u32[144,128]{1,0:T(1,128)}', space=vmem, size = 0x12000, scoped, tag = 'internal scratch']
  %s0 = inlined_call_operand.hbm [shape: f32[1,2048], index: 0, kind: input, shape index: {}]
  %s1 = inlined_call_operand.hbm [shape: f32[1,2048], index: 1, kind: output, shape index: {}]
  %s2 = sld [smem:[#allocation0]]
  $region18: #{tpu_custom_call.1} parent=0
    _
  %s4 = ssub.s32 1, %s2
  %s5 = scalar_select 0, %s4, %s2
  $region1: #{tpu_custom_call.1} parent=0
    #allocation2 [shape = 'u8[8192]{0}', space=vmem, size = 0x2000, scoped, tag = 'input window, operand 0, single buffered']
    #allocation3 [shape = 's32[1]{0}', space=sflag, size = 0x4, scoped, tag = 'scoped memory for tpu_custom_call.1']
    #allocation4 [shape = 's32[1]{0}', space=sflag, size = 0x4, scoped, tag = 'scoped memory for tpu_custom_call.1']
    #allocation5 [shape = 'u8[8192]{0}', space=vmem, size = 0x2000, scoped, tag = 'output window, operand 0, single buffered']
    %6 = vsyncpa [#allocation3], 0
    %7 = vsyncpa [#allocation4], 0
    // Predicated region
    $region2: #{tpu_custom_call.1} parent=1 // pred_check
      _
    $region3: #{tpu_custom_call.1} parent=1 // pred_check_branch
      %9 = sbr.rel (0) target = $region5
    $region4: #{tpu_custom_call.1} parent=1 // pred_region
      %s11 = ssub.s32 256, 256
      %12 = vsyncadd [#allocation3], %s11
      %s14 = sshll.u32 [#allocation2], 4
      %s15 = int_to_ptr.vmem [resolvable:$true] %s14
      %17 = dma.hbm_to_vmem [thread:$0]  %s0, 256, %s15, [#allocation3]
    $region5: #{tpu_custom_call.1} parent=1 // pred_fallthru
      _
    // Predicated region
    $region6: #{tpu_custom_call.1} parent=1 // pred_check
      _
    $region7: #{tpu_custom_call.1} parent=1 // pred_check_branch
      %19 = sbr.rel (0) target = $region9
    $region8: #{tpu_custom_call.1} parent=1 // pred_region
      %20 = dma.done [#allocation3], 256
    $region9: #{tpu_custom_call.1} parent=1 // pred_fallthru
      _
    %v21 = vld [vmem:[#allocation2] sm:$0xff]
    %v22 = vld [vmem:[#allocation2 + $0x8] sm:$0xff]
    %23 = vst [vmem:[#allocation5] sm:$0xff] %v21
    %24 = vst [vmem:[#allocation5 + $0x8] sm:$0xff] %v22
    // Predicated region
    $region10: #{tpu_custom_call.1} parent=1 // pred_check
      _
    $region11: #{tpu_custom_call.1} parent=1 // pred_check_branch
      %26 = sbr.rel (0) target = $region13
    $region12: #{tpu_custom_call.1} parent=1 // pred_region
      %s28 = ssub.s32 256, 256
      %29 = vsyncadd [#allocation4], %s28
      %s31 = sshll.u32 [#allocation5], 4
      %s32 = int_to_ptr.vmem [resolvable:$true] %s31
      %34 = dma.vmem_to_hbm [thread:$0]  %s32, 256, %s1, [#allocation4]
    $region13: #{tpu_custom_call.1} parent=1 // pred_fallthru
      _
    // Predicated region
    $region14: #{tpu_custom_call.1} parent=1 // pred_check
      _
    $region15: #{tpu_custom_call.1} parent=1 // pred_check_branch
      %36 = sbr.rel (0) target = $region17
    $region16: #{tpu_custom_call.1} parent=1 // pred_region
      %37 = dma.done [#allocation4], 256
    $region17: #{tpu_custom_call.1} parent=1 // pred_fallthru
      _
    %38 = vsyncpa [#allocation3], 1
    %39 = vsyncpa [#allocation4], 1

</llo_original>
